<compile_context>
chip_gen: v7x
topology: tpu7x:2x2x1
jax: 0.10.0
libtpu: 0.0.40
codegen_flags: <defaults>
</compile_context>

<pallas_src>
import functools

import jax
import jax.numpy as jnp
from jax.experimental import pallas as pl
from jax.experimental.pallas import tpu as pltpu

BN_EPS = 1e-5


# ----------------------------- Pallas kernel --------------------------------

def edge_attn_kernel(a_self_ref, b_self_ref, a_x_ref, b_x_ref,
                     a_y_ref, b_y_ref, a_up_ref, b_up_ref,
                     x_ref, y_ref, o_ref, *, tq, matmul_dtype):
    X = x_ref[...]                                   # (Cx, HW)  channels-first
    Y = y_ref[...]                                   # (Cy, HW)

    # key-side projections over the full spatial extent (folded conv1x1 + BN)
    fself = jnp.dot(a_self_ref[...], X,
                    preferred_element_type=jnp.float32) + b_self_ref[...]   # (mid, HW)
    fy = jnp.dot(a_y_ref[...], Y,
                 preferred_element_type=jnp.float32) + b_y_ref[...]         # (mid, HW)

    # query-side projection only for this tile (lane slice at tq-aligned offset)
    q0 = pl.multiple_of(pl.program_id(1) * tq, tq)
    Xq = x_ref[:, pl.ds(q0, tq)]                     # (Cx, tq)
    fx = jnp.dot(a_x_ref[...], Xq,
                 preferred_element_type=jnp.float32) + b_x_ref[...]         # (mid, tq)

    # sim[q, k] = sum_m fx[m, q] * fy[m, k]   (contract the mid/sublane axis)
    sim = jax.lax.dot_general(
        fx.astype(matmul_dtype), fy.astype(matmul_dtype),
        (((0,), (0,)), ((), ())),
        preferred_element_type=jnp.float32)          # (tq, HW)

    # numerically stable softmax over keys (lane-dense last dim), f32
    sim = sim - jnp.max(sim, axis=-1, keepdims=True)
    p = jnp.exp(sim)
    p = p * pl.reciprocal(jnp.sum(p, axis=-1, keepdims=True), approx=True)

    # fout[m, q] = sum_k fself[m, k] * p[q, k]
    fout = jax.lax.dot_general(
        fself.astype(matmul_dtype), p.astype(matmul_dtype),
        (((1,), (1,)), ((), ())),
        preferred_element_type=jnp.float32)          # (mid, tq)

    # f_up (folded conv1x1 + BN)
    out = jnp.dot(a_up_ref[...], fout,
                  preferred_element_type=jnp.float32) + b_up_ref[...]       # (Cx, tq)
    o_ref[...] = out.astype(o_ref.dtype)


# ----------------------------- parameter folding ----------------------------

def _fold_bn(gamma, beta, mean, var):
    s = gamma / jnp.sqrt(var + BN_EPS)
    return s, beta - mean * s


def _fold_conv_bn_pair(w1, bn1, w2, bn2):
    # conv1x1(nobias) -> BN -> conv1x1(nobias) -> BN   ==>   out = A @ x + b
    s1, c1 = _fold_bn(*bn1)
    s2, c2 = _fold_bn(*bn2)
    A1 = w1 * s1[:, None]            # (mid, cin)
    A2 = w2 * s2[:, None]            # (mid, mid)
    return A2 @ A1, A2 @ c1 + c2     # (mid, cin), (mid,)


def _fold_conv_bn(w, bn):
    s, c = _fold_bn(*bn)
    return w * s[:, None], c         # (cout, cin), (cout,)


# ----------------------------- wrapper ---------------------------------------

def edge_attention_forward(x, y, params, mid_channels, scale=False, tq=None,
                           matmul_dtype=jnp.bfloat16):
    B, Cx, H, W = x.shape
    _, Cy, _, _ = y.shape
    HW = H * W

    A_self, b_self = _fold_conv_bn_pair(*params["f_self"])
    A_x, b_x = _fold_conv_bn_pair(*params["f_x"])
    A_y, b_y = _fold_conv_bn_pair(*params["f_y"])
    A_up, b_up = _fold_conv_bn(*params["f_up"])

    if scale:                                   # fold mid**-0.5 into the f_x affine
        s = mid_channels ** -0.5
        A_x, b_x = A_x * s, b_x * s

    # column-vector biases so they broadcast over the lane (spatial) axis
    b_self, b_x, b_y, b_up = (v[:, None] for v in (b_self, b_x, b_y, b_up))

    # channels-first flatten: NCHW -> (B, C, HW); no transposes needed
    x_flat = x.reshape(B, Cx, HW)
    y_flat = y.reshape(B, Cy, HW)

    if tq is None:
        tq = HW
        for cand in (512, 256, 128):
            if HW % cand == 0:
                tq = cand
                break
    if HW % tq != 0:
        raise ValueError(f"tq={tq} must divide HW={HW}")
    nq = HW // tq

    kernel = functools.partial(edge_attn_kernel, tq=tq, matmul_dtype=matmul_dtype)

    # advisory cost estimate for the XLA scheduler
    flops = B * (
        nq * (2 * mid_channels * Cx * HW          # fself (recomputed per tile)
              + 2 * mid_channels * Cy * HW        # fy    (recomputed per tile)
              + 2 * mid_channels * Cx * tq        # fx tile
              + 2 * tq * HW * mid_channels        # similarity
              + 2 * mid_channels * tq * HW        # aggregation
              + 2 * Cx * mid_channels * tq))      # f_up
    weight_elems = (2 * mid_channels * (Cx + Cy + 1 + 1)
                    + Cx * mid_channels + Cx)
    bytes_accessed = 4 * (2 * B * Cx * HW + B * Cy * HW + weight_elems)

    out_flat = pl.pallas_call(
        kernel,
        out_shape=jax.ShapeDtypeStruct((B, Cx, HW), jnp.float32),
        grid_spec=pltpu.PrefetchScalarGridSpec(
            num_scalar_prefetch=0,
            grid=(B, nq),
            in_specs=[
                # small folded weights first; constant index maps -> stay resident
                pl.BlockSpec((mid_channels, Cx), lambda b, q: (0, 0)),
                pl.BlockSpec((mid_channels, 1), lambda b, q: (0, 0)),
                pl.BlockSpec((mid_channels, Cx), lambda b, q: (0, 0)),
                pl.BlockSpec((mid_channels, 1), lambda b, q: (0, 0)),
                pl.BlockSpec((mid_channels, Cy), lambda b, q: (0, 0)),
                pl.BlockSpec((mid_channels, 1), lambda b, q: (0, 0)),
                pl.BlockSpec((Cx, mid_channels), lambda b, q: (0, 0)),
                pl.BlockSpec((Cx, 1), lambda b, q: (0, 0)),
                # activations: full spatial extent (keys), batch dim squeezed;
                # index constant over q -> block stays resident across the tile loop
                pl.BlockSpec((None, Cx, HW), lambda b, q: (b, 0, 0)),
                pl.BlockSpec((None, Cy, HW), lambda b, q: (b, 0, 0)),
            ],
            out_specs=pl.BlockSpec((None, Cx, tq), lambda b, q: (b, 0, q)),
        ),
        compiler_params=pltpu.CompilerParams(
            dimension_semantics=("parallel", "parallel"),
            # above the 16/32 MiB scoped defaults, below v7x's 64 MiB physical
            vmem_limit_bytes=48 * 1024 * 1024,
        ),
        cost_estimate=pl.CostEstimate(flops=int(flops),
                                      transcendentals=int(B * HW * HW),
                                      bytes_accessed=int(bytes_accessed)),
    )(A_self, b_self, A_x, b_x, A_y, b_y, A_up, b_up, x_flat, y_flat)

    return out_flat.reshape(B, Cx, H, W)


# ----------------------------- pure-JAX reference ----------------------------

def _bn_ref(x, gamma, beta, mean, var):
    inv = gamma / jnp.sqrt(var + BN_EPS)
    return (x - mean[None, :, None]) * inv[None, :, None] + beta[None, :, None]


def _conv1x1_ref(w, x):                       # w: (cout, cin), x: (B, cin, HW)
    return jnp.einsum("oc,bcn->bon", w, x)


def _branch_ref(x, w1, bn1, w2, bn2):
    h = _bn_ref(_conv1x1_ref(w1, x), *bn1)
    return _bn_ref(_conv1x1_ref(w2, h), *bn2)


def edge_attention_reference(x, y, params, mid_channels, scale=False):
    """f32 reference mirroring the PyTorch forward (eval-mode BN, no folding)."""
    B, Cx, H, W = x.shape
    _, Cy, _, _ = y.shape
    HW = H * W
    xf = x.reshape(B, Cx, HW)
    yf = y.reshape(B, Cy, HW)
    fself = _branch_ref(xf, *params["f_self"])          # (B, mid, HW)
    fx = _branch_ref(xf, *params["f_x"])                # (B, mid, HW)
    fy = _branch_ref(yf, *params["f_y"])                # (B, mid, HW)
    sim = jnp.einsum("bmq,bmk->bqk", fx, fy)            # (B, HW, HW)
    if scale:
        sim = sim * (mid_channels ** -0.5)
    p = jax.nn.softmax(sim, axis=-1)
    fout = jnp.einsum("bqk,bmk->bmq", p, fself)         # (B, mid, HW)
    w_up, bn_up = params["f_up"]
    out = _bn_ref(_conv1x1_ref(w_up, fout), *bn_up)     # (B, Cx, HW)
    return out.reshape(B, Cx, H, W)


# ----------------------------- parameter init --------------------------------

def init_params(key, xin_channels, yin_channels, mid_channels):
    def conv(k, cout, cin):
        return 0.2 * jax.random.normal(k, (cout, cin), jnp.float32)

    def bn(k, c):
        kg, kb, km, kv = jax.random.split(k, 4)
        gamma = 1.0 + 0.1 * jax.random.normal(kg, (c,), jnp.float32)
        beta = 0.1 * jax.random.normal(kb, (c,), jnp.float32)
        mean = 0.1 * jax.random.normal(km, (c,), jnp.float32)
        var = jax.random.uniform(kv, (c,), jnp.float32, 0.5, 1.5)
        return gamma, beta, mean, var

    ks = jax.random.split(key, 16)
    params = {
        "f_self": (conv(ks[0], mid_channels, xin_channels), bn(ks[1], mid_channels),
                   conv(ks[2], mid_channels, mid_channels), bn(ks[3], mid_channels)),
        "f_x":    (conv(ks[4], mid_channels, xin_channels), bn(ks[5], mid_channels),
                   conv(ks[6], mid_channels, mid_channels), bn(ks[7], mid_channels)),
        "f_y":    (conv(ks[8], mid_channels, yin_channels), bn(ks[9], mid_channels),
                   conv(ks[10], mid_channels, mid_channels), bn(ks[11], mid_channels)),
        # NOTE: PyTorch __init__ zero-inits f_up's BN weight/bias (all-zero output
        # at init).  We use nonzero values so the full compute path is exercised;
        # the forward math is unchanged.
        "f_up":   (conv(ks[12], xin_channels, mid_channels), bn(ks[13], xin_channels)),
    }
    return params


# ----------------------------- main ------------------------------------------

if __name__ == "__main__":
    B, Cx, Cy, H, W = 2, 4, 6, 16, 16
    MID = 8
    SCALE = True          # exercise the folded mid**-0.5 path

    key = jax.random.PRNGKey(0)
    kx, ky, kp = jax.random.split(key, 3)
    x = jax.random.normal(kx, (B, Cx, H, W), jnp.float32)   # NCHW, like PyTorch
    y = jax.random.normal(ky, (B, Cy, H, W), jnp.float32)
    params = init_params(kp, Cx, Cy, MID)

    # tq=128 -> grid (B, 2): exercises the query-tiled path (HW = 256)
    out = edge_attention_forward(x, y, params, MID, scale=SCALE, tq=128)
    out = jax.block_until_ready(out)

    ref = edge_attention_reference(x, y, params, MID, scale=SCALE)
    assert out.shape == (B, Cx, H, W)
    # bf16 MXU inputs on the two HW x HW matmuls -> relaxed tolerance vs f32 ref
    assert jnp.allclose(out, ref, atol=2e-2, rtol=2e-2), "mismatch vs reference"

    print("KERNEL_OK")
</pallas_src>

<mosaic_0001>
module attributes {stable_mosaic.version = 11 : i64} {
  func.func @edge_attn_kernel(%arg0: i32, %arg1: i32, %arg2: memref<8x4xf32, #tpu.memory_space<vmem>>, %arg3: memref<8x1xf32, #tpu.memory_space<vmem>>, %arg4: memref<8x4xf32, #tpu.memory_space<vmem>>, %arg5: memref<8x1xf32, #tpu.memory_space<vmem>>, %arg6: memref<8x6xf32, #tpu.memory_space<vmem>>, %arg7: memref<8x1xf32, #tpu.memory_space<vmem>>, %arg8: memref<4x8xf32, #tpu.memory_space<vmem>>, %arg9: memref<4x1xf32, #tpu.memory_space<vmem>>, %arg10: memref<1x4x256xf32, #tpu.memory_space<vmem>>, %arg11: memref<1x6x256xf32, #tpu.memory_space<vmem>>, %arg12: memref<1x4x128xf32, #tpu.memory_space<vmem>>) attributes {dimension_semantics = [#tpu.dimension_semantics<parallel>, #tpu.dimension_semantics<parallel>], iteration_bounds = array<i64: 2, 2>, scalar_prefetch = 0 : i64, scratch_operands = 0 : i64, tpu.core_type = #tpu.core_type<tc>, window_params = [{pipeline_mode = #tpu.pipeline_mode<synchronous>, transform_indices = @transform_0, window_bounds = array<i64: 8, 4>}, {pipeline_mode = #tpu.pipeline_mode<synchronous>, transform_indices = @transform_1, window_bounds = array<i64: 8, 1>}, {pipeline_mode = #tpu.pipeline_mode<synchronous>, transform_indices = @transform_2, window_bounds = array<i64: 8, 4>}, {pipeline_mode = #tpu.pipeline_mode<synchronous>, transform_indices = @transform_3, window_bounds = array<i64: 8, 1>}, {pipeline_mode = #tpu.pipeline_mode<synchronous>, transform_indices = @transform_4, window_bounds = array<i64: 8, 6>}, {pipeline_mode = #tpu.pipeline_mode<synchronous>, transform_indices = @transform_5, window_bounds = array<i64: 8, 1>}, {pipeline_mode = #tpu.pipeline_mode<synchronous>, transform_indices = @transform_6, window_bounds = array<i64: 4, 8>}, {pipeline_mode = #tpu.pipeline_mode<synchronous>, transform_indices = @transform_7, window_bounds = array<i64: 4, 1>}, {transform_indices = @transform_8, window_bounds = array<i64: 1, 4, 256>}, {transform_indices = @transform_9, window_bounds = array<i64: 1, 6, 256>}, {transform_indices = @transform_10, window_bounds = array<i64: 1, 4, 128>}]} {
    %c0 = arith.constant 0 : index
    %c0_0 = arith.constant 0 : index
    %c0_1 = arith.constant 0 : index
    %0 = vector.load %arg10[%c0, %c0_0, %c0_1] : memref<1x4x256xf32, #tpu.memory_space<vmem>>, vector<1x4x256xf32>
    %1 = vector.shape_cast %0 : vector<1x4x256xf32> to vector<4x256xf32>
    %c0_2 = arith.constant 0 : index
    %c0_3 = arith.constant 0 : index
    %c0_4 = arith.constant 0 : index
    %2 = vector.load %arg11[%c0_2, %c0_3, %c0_4] : memref<1x6x256xf32, #tpu.memory_space<vmem>>, vector<1x6x256xf32>
    %3 = vector.shape_cast %2 : vector<1x6x256xf32> to vector<6x256xf32>
    %c0_5 = arith.constant 0 : index
    %c0_6 = arith.constant 0 : index
    %4 = vector.load %arg2[%c0_5, %c0_6] : memref<8x4xf32, #tpu.memory_space<vmem>>, vector<8x4xf32>
    %cst = arith.constant dense<0.000000e+00> : vector<8x256xf32>
    %5 = tpu.matmul %4, %1, %cst {dimension_numbers = #tpu.dot_dimension_numbers<[1], [0], [0], [1], [0, 0, 1, 1], [], []>} : vector<8x4xf32>, vector<4x256xf32>, vector<8x256xf32> -> vector<8x256xf32>
    %c0_7 = arith.constant 0 : index
    %c0_8 = arith.constant 0 : index
    %6 = vector.load %arg3[%c0_7, %c0_8] : memref<8x1xf32, #tpu.memory_space<vmem>>, vector<8x1xf32>
    %7 = vector.broadcast %6 : vector<8x1xf32> to vector<8x256xf32>
    %8 = arith.addf %5, %7 : vector<8x256xf32>
    %c0_9 = arith.constant 0 : index
    %c0_10 = arith.constant 0 : index
    %9 = vector.load %arg6[%c0_9, %c0_10] : memref<8x6xf32, #tpu.memory_space<vmem>>, vector<8x6xf32>
    %cst_11 = arith.constant dense<0.000000e+00> : vector<8x256xf32>
    %10 = tpu.matmul %9, %3, %cst_11 {dimension_numbers = #tpu.dot_dimension_numbers<[1], [0], [0], [1], [0, 0, 1, 1], [], []>} : vector<8x6xf32>, vector<6x256xf32>, vector<8x256xf32> -> vector<8x256xf32>
    %c0_12 = arith.constant 0 : index
    %c0_13 = arith.constant 0 : index
    %11 = vector.load %arg7[%c0_12, %c0_13] : memref<8x1xf32, #tpu.memory_space<vmem>>, vector<8x1xf32>
    %12 = vector.broadcast %11 : vector<8x1xf32> to vector<8x256xf32>
    %13 = arith.addf %10, %12 : vector<8x256xf32>
    %c128_i32 = arith.constant 128 : i32
    %14 = arith.muli %arg1, %c128_i32 : i32
    %15 = tpu.assume_multiple %14, 128 : i32
    %c0_14 = arith.constant 0 : index
    %c0_15 = arith.constant 0 : index
    %16 = arith.index_cast %15 : i32 to index
    %17 = vector.load %arg10[%c0_14, %c0_15, %16] : memref<1x4x256xf32, #tpu.memory_space<vmem>>, vector<1x4x128xf32>
    %18 = vector.shape_cast %17 : vector<1x4x128xf32> to vector<4x128xf32>
    %c0_16 = arith.constant 0 : index
    %c0_17 = arith.constant 0 : index
    %19 = vector.load %arg4[%c0_16, %c0_17] : memref<8x4xf32, #tpu.memory_space<vmem>>, vector<8x4xf32>
    %cst_18 = arith.constant dense<0.000000e+00> : vector<8x128xf32>
    %20 = tpu.matmul %19, %18, %cst_18 {dimension_numbers = #tpu.dot_dimension_numbers<[1], [0], [0], [1], [0, 0, 1, 1], [], []>} : vector<8x4xf32>, vector<4x128xf32>, vector<8x128xf32> -> vector<8x128xf32>
    %c0_19 = arith.constant 0 : index
    %c0_20 = arith.constant 0 : index
    %21 = vector.load %arg5[%c0_19, %c0_20] : memref<8x1xf32, #tpu.memory_space<vmem>>, vector<8x1xf32>
    %22 = vector.broadcast %21 : vector<8x1xf32> to vector<8x128xf32>
    %23 = arith.addf %20, %22 : vector<8x128xf32>
    %24 = arith.truncf %23 : vector<8x128xf32> to vector<8x128xbf16>
    %25 = arith.truncf %13 : vector<8x256xf32> to vector<8x256xbf16>
    %cst_21 = arith.constant dense<0.000000e+00> : vector<128x256xf32>
    %26 = tpu.matmul %24, %25, %cst_21 {dimension_numbers = #tpu.dot_dimension_numbers<[0], [0], [1], [1], [0, 1, 1, 1], [], []>} : vector<8x128xbf16>, vector<8x256xbf16>, vector<128x256xf32> -> vector<128x256xf32>
    %cst_22 = arith.constant dense<0xFF800000> : vector<128xf32>
    %27 = vector.multi_reduction <maximumf>, %26, %cst_22 [1] : vector<128x256xf32> to vector<128xf32>
    %28 = vector.shape_cast %27 : vector<128xf32> to vector<128x1xf32>
    %29 = vector.broadcast %28 : vector<128x1xf32> to vector<128x256xf32>
    %30 = arith.subf %26, %29 : vector<128x256xf32>
    %31 = math.exp %30 : vector<128x256xf32>
    %cst_23 = arith.constant dense<0.000000e+00> : vector<128xf32>
    %32 = vector.multi_reduction <add>, %31, %cst_23 [1] : vector<128x256xf32> to vector<128xf32>
    %33 = vector.shape_cast %32 : vector<128xf32> to vector<128x1xf32>
    %34 = tpu.reciprocal %33 {approx = true} : vector<128x1xf32> -> vector<128x1xf32>
    %35 = vector.broadcast %34 : vector<128x1xf32> to vector<128x256xf32>
    %36 = arith.mulf %31, %35 : vector<128x256xf32>
    %37 = arith.truncf %8 : vector<8x256xf32> to vector<8x256xbf16>
    %38 = arith.truncf %36 : vector<128x256xf32> to vector<128x256xbf16>
    %cst_24 = arith.constant dense<0.000000e+00> : vector<8x128xf32>
    %39 = tpu.matmul %37, %38, %cst_24 {dimension_numbers = #tpu.dot_dimension_numbers<[1], [1], [0], [0], [0, 0, 1, 0], [], []>} : vector<8x256xbf16>, vector<128x256xbf16>, vector<8x128xf32> -> vector<8x128xf32>
    %c0_25 = arith.constant 0 : index
    %c0_26 = arith.constant 0 : index
    %40 = vector.load %arg8[%c0_25, %c0_26] : memref<4x8xf32, #tpu.memory_space<vmem>>, vector<4x8xf32>
    %cst_27 = arith.constant dense<0.000000e+00> : vector<4x128xf32>
    %41 = tpu.matmul %40, %39, %cst_27 {dimension_numbers = #tpu.dot_dimension_numbers<[1], [0], [0], [1], [0, 0, 1, 1], [], []>} : vector<4x8xf32>, vector<8x128xf32>, vector<4x128xf32> -> vector<4x128xf32>
    %c0_28 = arith.constant 0 : index
    %c0_29 = arith.constant 0 : index
    %42 = vector.load %arg9[%c0_28, %c0_29] : memref<4x1xf32, #tpu.memory_space<vmem>>, vector<4x1xf32>
    %43 = vector.broadcast %42 : vector<4x1xf32> to vector<4x128xf32>
    %44 = arith.addf %41, %43 : vector<4x128xf32>
    %c0_30 = arith.constant 0 : index
    %c0_31 = arith.constant 0 : index
    %c0_32 = arith.constant 0 : index
    %45 = vector.load %arg12[%c0_30, %c0_31, %c0_32] : memref<1x4x128xf32, #tpu.memory_space<vmem>>, vector<1x4x128xf32>
    %46 = vector.shape_cast %45 : vector<1x4x128xf32> to vector<4x128xf32>
    %47 = vector.shape_cast %44 : vector<4x128xf32> to vector<1x4x128xf32>
    tpu.vector_store %arg12[%c0_30, %c0_31, %c0_32], %47 {strides = array<i32>} : memref<1x4x128xf32, #tpu.memory_space<vmem>>, vector<1x4x128xf32>,
    return
  }
  func.func @transform_0(%arg0: i32, %arg1: i32) -> (i32, i32) {
    %c0_i32 = arith.constant 0 : i32
    %c0_i32_0 = arith.constant 0 : i32
    %c0_i32_1 = arith.constant 0 : i32
    return %c0_i32, %c0_i32_0 : i32, i32
  }
  func.func @transform_1(%arg0: i32, %arg1: i32) -> (i32, i32) {
    %c0_i32 = arith.constant 0 : i32
    %c0_i32_0 = arith.constant 0 : i32
    %c0_i32_1 = arith.constant 0 : i32
    return %c0_i32, %c0_i32_0 : i32, i32
  }
  func.func @transform_2(%arg0: i32, %arg1: i32) -> (i32, i32) {
    %c0_i32 = arith.constant 0 : i32
    %c0_i32_0 = arith.constant 0 : i32
    %c0_i32_1 = arith.constant 0 : i32
    return %c0_i32, %c0_i32_0 : i32, i32
  }
  func.func @transform_3(%arg0: i32, %arg1: i32) -> (i32, i32) {
    %c0_i32 = arith.constant 0 : i32
    %c0_i32_0 = arith.constant 0 : i32
    %c0_i32_1 = arith.constant 0 : i32
    return %c0_i32, %c0_i32_0 : i32, i32
  }
  func.func @transform_4(%arg0: i32, %arg1: i32) -> (i32, i32) {
    %c0_i32 = arith.constant 0 : i32
    %c0_i32_0 = arith.constant 0 : i32
    %c0_i32_1 = arith.constant 0 : i32
    return %c0_i32, %c0_i32_0 : i32, i32
  }
  func.func @transform_5(%arg0: i32, %arg1: i32) -> (i32, i32) {
    %c0_i32 = arith.constant 0 : i32
    %c0_i32_0 = arith.constant 0 : i32
    %c0_i32_1 = arith.constant 0 : i32
    return %c0_i32, %c0_i32_0 : i32, i32
  }
  func.func @transform_6(%arg0: i32, %arg1: i32) -> (i32, i32) {
    %c0_i32 = arith.constant 0 : i32
    %c0_i32_0 = arith.constant 0 : i32
    %c0_i32_1 = arith.constant 0 : i32
    return %c0_i32, %c0_i32_0 : i32, i32
  }
  func.func @transform_7(%arg0: i32, %arg1: i32) -> (i32, i32) {
    %c0_i32 = arith.constant 0 : i32
    %c0_i32_0 = arith.constant 0 : i32
    %c0_i32_1 = arith.constant 0 : i32
    return %c0_i32, %c0_i32_0 : i32, i32
  }
  func.func @transform_8(%arg0: i32, %arg1: i32) -> (i32, i32, i32) {
    %c0_i32 = arith.constant 0 : i32
    %c0_i32_0 = arith.constant 0 : i32
    %c0_i32_1 = arith.constant 0 : i32
    return %arg0, %c0_i32, %c0_i32_0 : i32, i32, i32
  }
  func.func @transform_9(%arg0: i32, %arg1: i32) -> (i32, i32, i32) {
    %c0_i32 = arith.constant 0 : i32
    %c0_i32_0 = arith.constant 0 : i32
    %c0_i32_1 = arith.constant 0 : i32
    return %arg0, %c0_i32, %c0_i32_0 : i32, i32, i32
  }
  func.func @transform_10(%arg0: i32, %arg1: i32) -> (i32, i32, i32) {
    %c0_i32 = arith.constant 0 : i32
    %c0_i32_0 = arith.constant 0 : i32
    return %arg0, %c0_i32, %arg1 : i32, i32, i32
  }
}

</mosaic_0001>

<llo_original>
// kernel: tpu_custom_call.1
$region0: #{tpu_custom_call.1}
  #allocation0 [shape = 'u32[]', space=smem, size = 0x4, offset = 0x4, fixed_abs, tag = 'smem constant byte address 0x4 - core index']
  #allocation1 [shape = 'u32[144,128]{1,0:T(1,128)}', space=vmem, size = 0x12000, scoped, tag = 'internal scratch']
  %s0 = inlined_call_operand.vmem [shape: f32[8,4], index: 0, kind: input, shape index: {}]
  %s1 = inlined_call_operand.vmem [shape: f32[8,1], index: 1, kind: input, shape index: {}]
  %s2 = inlined_call_operand.vmem [shape: f32[8,4], index: 2, kind: input, shape index: {}]
  %s3 = inlined_call_operand.vmem [shape: f32[8,1], index: 3, kind: input, shape index: {}]
  %s4 = inlined_call_operand.vmem [shape: f32[8,6], index: 4, kind: input, shape index: {}]
  %s5 = inlined_call_operand.vmem [shape: f32[8,1], index: 5, kind: input, shape index: {}]
  %s6 = inlined_call_operand.vmem [shape: f32[4,8], index: 6, kind: input, shape index: {}]
  %s7 = inlined_call_operand.vmem [shape: f32[4,1], index: 7, kind: input, shape index: {}]
  %s8 = inlined_call_operand.vmem [shape: f32[2,4,256], index: 8, kind: input, shape index: {}]
  %s9 = inlined_call_operand.vmem [shape: f32[2,6,256], index: 9, kind: input, shape index: {}]
  %s10 = inlined_call_operand.hbm [shape: f32[2,4,256], index: 10, kind: output, shape index: {}]
  %s11 = sld [smem:[#allocation0]]
  $region73: #{tpu_custom_call.1} parent=0
    _
  %s13 = ssub.s32 1, %s11
  %s14 = scalar_select 0, %s13, %s11
  $region1: #{tpu_custom_call.1} parent=0
    #allocation2 [shape = 'u8[4096]{0}', space=vmem, size = 0x1000, scoped, tag = 'output window, operand 0']
    #allocation3 [shape = 's32[2]{0}', space=sflag, size = 0x8, scoped, tag = 'scoped memory for tpu_custom_call.1']
    %15 = vsyncpa [#allocation3], 0
    %s16 = scalar_lea.sflag [#allocation3], 1
    %17 = vsyncpa %s16, 0
    loop: start=0, step=1, limit=6
    $region2: #{tpu_custom_call.1} parent=1 // loop_pre_header
      _
    $region3: #{tpu_custom_call.1} parent=1 // loop_header
      %s19 = sphi 0, %s23
      %p20 = scmp.ge.s32.totalorder %s19, 6
      %s26 = sphi 0, %s38
      %s27 = sphi 0, %s34
      %s28 = sphi 0, %s26
      %s29 = sphi 0, %s27
      %s30 = sphi 0, %s28
      %s31 = sphi 0, %s29
      %s39 = sphi 0, %s39
      %s41 = sphi 0, %s39
      %s42 = sphi 0, %s41
      %s56 = sphi 0, %s42
      %s60 = sphi 0, %s60
      %s62 = sphi 0, %s60
      %s63 = sphi 0, %s62
      %s77 = sphi 0, %s63
      %s81 = sphi 0, %s81
      %s83 = sphi 0, %s81
      %s84 = sphi 0, %s83
      %s98 = sphi 0, %s84
      %s102 = sphi 0, %s102
      %s104 = sphi 0, %s102
      %s105 = sphi 0, %s104
      %s119 = sphi 0, %s105
      %s123 = sphi 0, %s123
      %s125 = sphi 0, %s123
      %s126 = sphi 0, %s125
      %s140 = sphi 0, %s126
      %s144 = sphi 0, %s144
      %s146 = sphi 0, %s144
      %s147 = sphi 0, %s146
      %s161 = sphi 0, %s147
      %s165 = sphi 0, %s165
      %s167 = sphi 0, %s165
      %s168 = sphi 0, %s167
      %s182 = sphi 0, %s168
      %s186 = sphi 0, %s186
      %s188 = sphi 0, %s186
      %s189 = sphi 0, %s188
      %s203 = sphi 0, %s189
      %s209 = sphi 0, %s211
      %s212 = sphi 0, %s209
      %s213 = sphi 0, %s212
      %s229 = sphi 0, %s213
      %s235 = sphi 0, %s237
      %s238 = sphi 0, %s235
      %s239 = sphi 0, %s238
      %s255 = sphi 0, %s239
      %s263 = sphi 0, %s265
      %s266 = sphi 0, %s263
      %s267 = sphi 0, %s266
      %s283 = sphi 0, %s267
    $region4: #{tpu_custom_call.1} parent=1 // loop_header_branch
      %22 = sbr.rel (%p20) target = $region8
    $region5: #{tpu_custom_call.1} parent=1 // loop_body
      %s24 = ssub.s32 %s19, 1
      %s25 = ssub.s32 %s19, 2
      %s32 = sadd.s32 1, %s27
      %p33 = scmp.ge.s32.totalorder %s32, 2
      %s34 = scalar_select %p33, 0, %s32
      %s35 = sadd.s32 1, %s26
      %s36 = scalar_select %p33, %s35, %s26
      %p37 = scmp.ge.s32.totalorder %s36, 2
      %s38 = scalar_select %p37, 0, %s36
      %s40 = sadd.s32 %s39, 1
      %p43 = scmp.eq.s32.totalorder %s19, 3
      %p44 = scmp.ne.s32.totalorder %s39, %s41
      %p45 = scmp.eq.s32.totalorder %s19, 0
      %p46 = por %p44, %p45
      %p47 = scmp.ne.s32.totalorder %s39, %s41
      %p48 = scmp.eq.s32.totalorder %s24, 3
      %p49 = por %p47, %p48
      %p50 = scmp.ne.s32.totalorder %s41, %s42
      %p51 = scmp.eq.s32.totalorder %s24, 0
      %p52 = por %p50, %p51
      %p53 = scmp.ne.s32.totalorder %s41, %s42
      %p54 = scmp.eq.s32.totalorder %s25, 3
      %p55 = por %p53, %p54
      %p57 = scmp.ne.s32.totalorder %s42, %s56
      %p58 = scmp.eq.s32.totalorder %s25, 0
      %p59 = por %p57, %p58
      %s61 = sadd.s32 %s60, 1
      %p64 = scmp.eq.s32.totalorder %s19, 3
      %p65 = scmp.ne.s32.totalorder %s60, %s62
      %p66 = scmp.eq.s32.totalorder %s19, 0
      %p67 = por %p65, %p66
      %p68 = scmp.ne.s32.totalorder %s60, %s62
      %p69 = scmp.eq.s32.totalorder %s24, 3
      %p70 = por %p68, %p69
      %p71 = scmp.ne.s32.totalorder %s62, %s63
      %p72 = scmp.eq.s32.totalorder %s24, 0
      %p73 = por %p71, %p72
      %p74 = scmp.ne.s32.totalorder %s62, %s63
      %p75 = scmp.eq.s32.totalorder %s25, 3
      %p76 = por %p74, %p75
      %p78 = scmp.ne.s32.totalorder %s63, %s77
      %p79 = scmp.eq.s32.totalorder %s25, 0
      %p80 = por %p78, %p79
      %s82 = sadd.s32 %s81, 1
      %p85 = scmp.eq.s32.totalorder %s19, 3
      %p86 = scmp.ne.s32.totalorder %s81, %s83
      %p87 = scmp.eq.s32.totalorder %s19, 0
      %p88 = por %p86, %p87
      %p89 = scmp.ne.s32.totalorder %s81, %s83
      %p90 = scmp.eq.s32.totalorder %s24, 3
      %p91 = por %p89, %p90
      %p92 = scmp.ne.s32.totalorder %s83, %s84
      %p93 = scmp.eq.s32.totalorder %s24, 0
      %p94 = por %p92, %p93
      %p95 = scmp.ne.s32.totalorder %s83, %s84
      %p96 = scmp.eq.s32.totalorder %s25, 3
      %p97 = por %p95, %p96
      %p99 = scmp.ne.s32.totalorder %s84, %s98
      %p100 = scmp.eq.s32.totalorder %s25, 0
      %p101 = por %p99, %p100
      %s103 = sadd.s32 %s102, 1
      %p106 = scmp.eq.s32.totalorder %s19, 3
      %p107 = scmp.ne.s32.totalorder %s102, %s104
      %p108 = scmp.eq.s32.totalorder %s19, 0
      %p109 = por %p107, %p108
      %p110 = scmp.ne.s32.totalorder %s102, %s104
      %p111 = scmp.eq.s32.totalorder %s24, 3
      %p112 = por %p110, %p111
      %p113 = scmp.ne.s32.totalorder %s104, %s105
      %p114 = scmp.eq.s32.totalorder %s24, 0
      %p115 = por %p113, %p114
      %p116 = scmp.ne.s32.totalorder %s104, %s105
      %p117 = scmp.eq.s32.totalorder %s25, 3
      %p118 = por %p116, %p117
      %p120 = scmp.ne.s32.totalorder %s105, %s119
      %p121 = scmp.eq.s32.totalorder %s25, 0
      %p122 = por %p120, %p121
      %s124 = sadd.s32 %s123, 1
      %p127 = scmp.eq.s32.totalorder %s19, 3
      %p128 = scmp.ne.s32.totalorder %s123, %s125
      %p129 = scmp.eq.s32.totalorder %s19, 0
      %p130 = por %p128, %p129
      %p131 = scmp.ne.s32.totalorder %s123, %s125
      %p132 = scmp.eq.s32.totalorder %s24, 3
      %p133 = por %p131, %p132
      %p134 = scmp.ne.s32.totalorder %s125, %s126
      %p135 = scmp.eq.s32.totalorder %s24, 0
      %p136 = por %p134, %p135
      %p137 = scmp.ne.s32.totalorder %s125, %s126
      %p138 = scmp.eq.s32.totalorder %s25, 3
      %p139 = por %p137, %p138
      %p141 = scmp.ne.s32.totalorder %s126, %s140
      %p142 = scmp.eq.s32.totalorder %s25, 0
      %p143 = por %p141, %p142
      %s145 = sadd.s32 %s144, 1
      %p148 = scmp.eq.s32.totalorder %s19, 3
      %p149 = scmp.ne.s32.totalorder %s144, %s146
      %p150 = scmp.eq.s32.totalorder %s19, 0
      %p151 = por %p149, %p150
      %p152 = scmp.ne.s32.totalorder %s144, %s146
      %p153 = scmp.eq.s32.totalorder %s24, 3
      %p154 = por %p152, %p153
      %p155 = scmp.ne.s32.totalorder %s146, %s147
      %p156 = scmp.eq.s32.totalorder %s24, 0
      %p157 = por %p155, %p156
      %p158 = scmp.ne.s32.totalorder %s146, %s147
      %p159 = scmp.eq.s32.totalorder %s25, 3
      %p160 = por %p158, %p159
      %p162 = scmp.ne.s32.totalorder %s147, %s161
      %p163 = scmp.eq.s32.totalorder %s25, 0
      %p164 = por %p162, %p163
      %s166 = sadd.s32 %s165, 1
      %p169 = scmp.eq.s32.totalorder %s19, 3
      %p170 = scmp.ne.s32.totalorder %s165, %s167
      %p171 = scmp.eq.s32.totalorder %s19, 0
      %p172 = por %p170, %p171
      %p173 = scmp.ne.s32.totalorder %s165, %s167
      %p174 = scmp.eq.s32.totalorder %s24, 3
      %p175 = por %p173, %p174
      %p176 = scmp.ne.s32.totalorder %s167, %s168
      %p177 = scmp.eq.s32.totalorder %s24, 0
      %p178 = por %p176, %p177
      %p179 = scmp.ne.s32.totalorder %s167, %s168
      %p180 = scmp.eq.s32.totalorder %s25, 3
      %p181 = por %p179, %p180
      %p183 = scmp.ne.s32.totalorder %s168, %s182
      %p184 = scmp.eq.s32.totalorder %s25, 0
      %p185 = por %p183, %p184
      %s187 = sadd.s32 %s186, 1
      %p190 = scmp.eq.s32.totalorder %s19, 3
      %p191 = scmp.ne.s32.totalorder %s186, %s188
      %p192 = scmp.eq.s32.totalorder %s19, 0
      %p193 = por %p191, %p192
      %p194 = scmp.ne.s32.totalorder %s186, %s188
      %p195 = scmp.eq.s32.totalorder %s24, 3
      %p196 = por %p194, %p195
      %p197 = scmp.ne.s32.totalorder %s188, %s189
      %p198 = scmp.eq.s32.totalorder %s24, 0
      %p199 = por %p197, %p198
      %p200 = scmp.ne.s32.totalorder %s188, %s189
      %p201 = scmp.eq.s32.totalorder %s25, 3
      %p202 = por %p200, %p201
      %p204 = scmp.ne.s32.totalorder %s189, %s203
      %p205 = scmp.eq.s32.totalorder %s25, 0
      %p206 = por %p204, %p205
      %s207 = ssub.s32 %s26, %s38
      %p208 = scmp.eq.s32.totalorder %s207, 0
      %s210 = sadd.s32 %s209, 1
      %s211 = scalar_select %p208, %s209, %s210
      %p214 = pneg %p208
      %p215 = scmp.eq.s32.totalorder %s19, 3
      %p216 = por %p214, %p215
      %p217 = scmp.ne.s32.totalorder %s209, %s212
      %p218 = scmp.eq.s32.totalorder %s19, 0
      %p219 = por %p217, %p218
      %p220 = scmp.ne.s32.totalorder %s209, %s212
      %p221 = scmp.eq.s32.totalorder %s24, 3
      %p222 = por %p220, %p221
      %p223 = scmp.ne.s32.totalorder %s212, %s213
      %p224 = scmp.eq.s32.totalorder %s24, 0
      %p225 = por %p223, %p224
      %p226 = scmp.ne.s32.totalorder %s212, %s213
      %p227 = scmp.eq.s32.totalorder %s25, 3
      %p228 = por %p226, %p227
      %p230 = scmp.ne.s32.totalorder %s213, %s229
      %p231 = scmp.eq.s32.totalorder %s25, 0
      %p232 = por %p230, %p231
      %s233 = ssub.s32 %s26, %s38
      %p234 = scmp.eq.s32.totalorder %s233, 0
      %s236 = sadd.s32 %s235, 1
      %s237 = scalar_select %p234, %s235, %s236
      %p240 = pneg %p234
      %p241 = scmp.eq.s32.totalorder %s19, 3
      %p242 = por %p240, %p241
      %p243 = scmp.ne.s32.totalorder %s235, %s238
      %p244 = scmp.eq.s32.totalorder %s19, 0
      %p245 = por %p243, %p244
      %p246 = scmp.ne.s32.totalorder %s235, %s238
      %p247 = scmp.eq.s32.totalorder %s24, 3
      %p248 = por %p246, %p247
      %p249 = scmp.ne.s32.totalorder %s238, %s239
      %p250 = scmp.eq.s32.totalorder %s24, 0
      %p251 = por %p249, %p250
      %p252 = scmp.ne.s32.totalorder %s238, %s239
      %p253 = scmp.eq.s32.totalorder %s25, 3
      %p254 = por %p252, %p253
      %p256 = scmp.ne.s32.totalorder %s239, %s255
      %p257 = scmp.eq.s32.totalorder %s25, 0
      %p258 = por %p256, %p257
      %s259 = ssub.s32 %s26, %s38
      %s260 = ssub.s32 %s27, %s34
      %s261 = sor.u32 %s259, %s260
      %p262 = scmp.eq.s32.totalorder %s261, 0
      %s264 = sadd.s32 %s263, 1
      %s265 = scalar_select %p262, %s263, %s264
      %p268 = pneg %p262
      %p269 = scmp.eq.s32.totalorder %s19, 3
      %p270 = por %p268, %p269
      %p271 = scmp.ne.s32.totalorder %s263, %s266
      %p272 = scmp.eq.s32.totalorder %s19, 0
      %p273 = por %p271, %p272
      %p274 = scmp.ne.s32.totalorder %s263, %s266
      %p275 = scmp.eq.s32.totalorder %s24, 3
      %p276 = por %p274, %p275
      %p277 = scmp.ne.s32.totalorder %s266, %s267
      %p278 = scmp.eq.s32.totalorder %s24, 0
      %p279 = por %p277, %p278
      %p280 = scmp.ne.s32.totalorder %s266, %s267
      %p281 = scmp.eq.s32.totalorder %s25, 3
      %p282 = por %p280, %p281
      %p284 = scmp.ne.s32.totalorder %s267, %s283
      %p285 = scmp.eq.s32.totalorder %s25, 0
      %p286 = por %p284, %p285
      %p287 = scmp.le.s32.totalorder 1, %s19
      %p288 = scmp.lt.s32.totalorder %s19, 5
      %p289 = pnand %p287, %p288
      %p290 = pneg %p289
      // Predicated region
      $region9: #{tpu_custom_call.1} parent=5 // pred_check
        _
      $region10: #{tpu_custom_call.1} parent=5 // pred_check_branch
        %292 = sbr.rel (%p289) target = $region12
      $region11: #{tpu_custom_call.1} parent=5 // pred_region
        %s293 = ssub.s32 %s19, 1
        // Predicated region
        $region13: #{tpu_custom_call.1} parent=11 // pred_check
          %p294 = pneg %p52
        $region14: #{tpu_custom_call.1} parent=11 // pred_check_branch
          %296 = sbr.rel (%p294) target = $region16
        $region15: #{tpu_custom_call.1} parent=11 // pred_region
          _
        $region16: #{tpu_custom_call.1} parent=11 // pred_fallthru
          _
        // Predicated region
        $region17: #{tpu_custom_call.1} parent=11 // pred_check
          %p297 = pneg %p73
        $region18: #{tpu_custom_call.1} parent=11 // pred_check_branch
          %299 = sbr.rel (%p297) target = $region20
        $region19: #{tpu_custom_call.1} parent=11 // pred_region
          _
        $region20: #{tpu_custom_call.1} parent=11 // pred_fallthru
          _
        // Predicated region
        $region21: #{tpu_custom_call.1} parent=11 // pred_check
          %p300 = pneg %p94
        $region22: #{tpu_custom_call.1} parent=11 // pred_check_branch
          %302 = sbr.rel (%p300) target = $region24
        $region23: #{tpu_custom_call.1} parent=11 // pred_region
          _
        $region24: #{tpu_custom_call.1} parent=11 // pred_fallthru
          _
        // Predicated region
        $region25: #{tpu_custom_call.1} parent=11 // pred_check
          %p303 = pneg %p115
        $region26: #{tpu_custom_call.1} parent=11 // pred_check_branch
          %305 = sbr.rel (%p303) target = $region28
        $region27: #{tpu_custom_call.1} parent=11 // pred_region
          _
        $region28: #{tpu_custom_call.1} parent=11 // pred_fallthru
          _
        // Predicated region
        $region29: #{tpu_custom_call.1} parent=11 // pred_check
          %p306 = pneg %p136
        $region30: #{tpu_custom_call.1} parent=11 // pred_check_branch
          %308 = sbr.rel (%p306) target = $region32
        $region31: #{tpu_custom_call.1} parent=11 // pred_region
          _
        $region32: #{tpu_custom_call.1} parent=11 // pred_fallthru
          _
        // Predicated region
        $region33: #{tpu_custom_call.1} parent=11 // pred_check
          %p309 = pneg %p157
        $region34: #{tpu_custom_call.1} parent=11 // pred_check_branch
          %311 = sbr.rel (%p309) target = $region36
        $region35: #{tpu_custom_call.1} parent=11 // pred_region
          _
        $region36: #{tpu_custom_call.1} parent=11 // pred_fallthru
          _
        // Predicated region
        $region37: #{tpu_custom_call.1} parent=11 // pred_check
          %p312 = pneg %p178
        $region38: #{tpu_custom_call.1} parent=11 // pred_check_branch
          %314 = sbr.rel (%p312) target = $region40
        $region39: #{tpu_custom_call.1} parent=11 // pred_region
          _
        $region40: #{tpu_custom_call.1} parent=11 // pred_fallthru
          _
        // Predicated region
        $region41: #{tpu_custom_call.1} parent=11 // pred_check
          %p315 = pneg %p199
        $region42: #{tpu_custom_call.1} parent=11 // pred_check_branch
          %317 = sbr.rel (%p315) target = $region44
        $region43: #{tpu_custom_call.1} parent=11 // pred_region
          _
        $region44: #{tpu_custom_call.1} parent=11 // pred_fallthru
          _
      $region12: #{tpu_custom_call.1} parent=5 // pred_fallthru
        _
      %p318 = scmp.lt.s32.totalorder %s19, 4
      // Predicated region
      $region45: #{tpu_custom_call.1} parent=5 // pred_check
        %p319 = pneg %p318
      $region46: #{tpu_custom_call.1} parent=5 // pred_check_branch
        %321 = sbr.rel (%p319) target = $region48
      $region47: #{tpu_custom_call.1} parent=5 // pred_region
        // Predicated region
        $region49: #{tpu_custom_call.1} parent=47 // pred_check
          %p322 = pneg %p219
        $region50: #{tpu_custom_call.1} parent=47 // pred_check_branch
          %324 = sbr.rel (%p322) target = $region52
        $region51: #{tpu_custom_call.1} parent=47 // pred_region
          %p325 = scmp.lt.s32.totalorder %s26, 1
          %s326 = scalar_select %p325, %s26, 1
          %s327 = smul.addr %s326, 2
          %s328 = smul.addr %s327, 4
          %s329 = scalar_lea.vmem %s8, %s328
        $region52: #{tpu_custom_call.1} parent=47 // pred_fallthru
          _
        // Predicated region
        $region53: #{tpu_custom_call.1} parent=47 // pred_check
          %p330 = pneg %p245
        $region54: #{tpu_custom_call.1} parent=47 // pred_check_branch
          %332 = sbr.rel (%p330) target = $region56
        $region55: #{tpu_custom_call.1} parent=47 // pred_region
          %p333 = scmp.lt.s32.totalorder %s26, 1
          %s334 = scalar_select %p333, %s26, 1
          %s335 = smul.addr %s334, 2
          %s336 = smul.addr %s335, 8
          %s337 = scalar_lea.vmem %s9, %s336
        $region56: #{tpu_custom_call.1} parent=47 // pred_fallthru
          _
      $region48: #{tpu_custom_call.1} parent=5 // pred_fallthru
        _
      %p338 = scmp.le.s32.totalorder 1, %s19
      %p339 = scmp.lt.s32.totalorder %s19, 5
      %p340 = pnand %p338, %p339
      %p341 = pneg %p340
      // Predicated region
      $region57: #{tpu_custom_call.1} parent=5 // pred_check
        _
      $region58: #{tpu_custom_call.1} parent=5 // pred_check_branch
        %343 = sbr.rel (%p340) target = $region60
      $region59: #{tpu_custom_call.1} parent=5 // pred_region
        %s344 = ssub.s32 %s19, 1
        %p345 = pneg %p52
        %p346 = pneg %p49
        %p347 = pneg %p73
        %p348 = pneg %p70
        %p349 = pneg %p94
        %p350 = pneg %p91
        %p351 = pneg %p115
        %p352 = pneg %p112
        %p353 = pneg %p136
        %p354 = pneg %p133
        %p355 = pneg %p157
        %p356 = pneg %p154
        %p357 = pneg %p178
        %p358 = pneg %p175
        %p359 = pneg %p199
        %p360 = pneg %p196
        %p361 = scmp.lt.s32.totalorder %s28, 1
        %s362 = scalar_select %p361, %s28, 1
        %s363 = smul.addr %s362, 2
        %s364 = smul.addr %s363, 4
        %s365 = scalar_lea.vmem %s8, %s364
        %p366 = pneg %p225
        %p367 = pneg %p222
        %p368 = scmp.lt.s32.totalorder %s28, 1
        %s369 = scalar_select %p368, %s28, 1
        %s370 = smul.addr %s369, 2
        %s371 = smul.addr %s370, 8
        %s372 = scalar_lea.vmem %s9, %s371
        %p373 = pneg %p251
        %p374 = pneg %p248
        %p375 = pneg %p279
        %p376 = pneg %p276
        %s377 = sand.u32 %s266, 1
        %s378 = scalar_lea.sflag [#allocation3], %s377
        %s379 = sand.u32 %s266, 1
        %s380 = smul.addr %s379, 4
        %s381 = scalar_lea.vmem [#allocation2], %s380
        %p382 = scmp.lt.s32.totalorder %s28, 1
        %s383 = scalar_select %p382, %s28, 1
        %s384 = smul.addr %s383, 2
        %s385 = smul.addr %s384, 4
        %s386 = scalar_lea.vmem %s8, %s385
        %p387 = scmp.lt.s32.totalorder %s28, 1
        %s388 = scalar_select %p387, %s28, 1
        %s389 = smul.addr %s388, 2
        %s390 = smul.addr %s389, 8
        %s391 = scalar_lea.vmem %s9, %s390
        %v393 = vld [vmem:[%s386] sm:$0xff]
        %v394 = vld [vmem:[%s391] sm:$0x3f]
        %v395 = vld [vmem:[%s391 + $0x8] sm:$0x3f]
        %v396 = vld [vmem:[%s0] sm:$0xff]
        %v397 = vld [vmem:[%s1] sm:$0xff]
        %399 = vset.pattern.permute.xlu0 0
        %400 = vperm.xlu0 %399, %v397
        %v401 = vpop.permute.xlu0 %400
        %v404 = vcombine.high %v393, %v393
        %vm405 = vcmask 31744
        %v407 = vsel %vm405, %v396, 0
        %vm409 = vcmask 1043456
        %v410 = vsel %vm409, %v393, 0
        %v412 = vsel %vm409, %v404, 0
        %414 = vmatprep.subr.mxu0 %v412
        %415 = vmatpush1.msra.mxu0 %v410
        %416 = vmatprep.subr.mxu0 0.0
        %417 = vmatpush1.msra.mxu0 0.0
        %418 = vmatprep.subr.mxu0 0.0
        %419 = vmatpush1.msra.mxu0 0.0
        %420 = vmatprep.subr.mxu0 0.0
        %421 = vmatpush1.msra.mxu0 0.0
        %422 = vmatprep.subr.mxu0 0.0
        %423 = vmatpush1.msra.mxu0 0.0
        %424 = vmatprep.subr.mxu0 0.0
        %425 = vmatpush1.msra.mxu0 0.0
        %426 = vmatprep.subr.mxu0 0.0
        %427 = vmatpush1.msra.mxu0 0.0
        %428 = vmatprep.subr.mxu0 0.0
        %429 = vmatpush1.msra.mxu0 0.0
        %430 = vmatprep.subr.mxu0 0.0
        %431 = vmatpush1.msra.mxu0 0.0
        %432 = vmatprep.subr.mxu0 0.0
        %433 = vmatpush1.msra.mxu0 0.0
        %434 = vmatprep.subr.mxu0 0.0
        %435 = vmatpush1.msra.mxu0 0.0
        %436 = vmatprep.subr.mxu0 0.0
        %437 = vmatpush1.msra.mxu0 0.0
        %438 = vmatprep.subr.mxu0 0.0
        %439 = vmatpush1.msra.mxu0 0.0
        %440 = vmatprep.subr.mxu0 0.0
        %441 = vmatpush1.msra.mxu0 0.0
        %442 = vmatprep.subr.mxu0 0.0
        %443 = vmatpush1.msra.mxu0 0.0
        %444 = vmatprep.subr.mxu0 0.0
        %445 = vmatpush1.msra.mxu0 0.0
        %446 = vmatprep.subr.mxu0 0.0
        %447 = vmatpush1.msra.mxu0 0.0
        %448 = vmatprep.subr.mxu0 0.0
        %449 = vmatpush1.msra.mxu0 0.0
        %450 = vmatprep.subr.mxu0 0.0
        %451 = vmatpush1.msra.mxu0 0.0
        %452 = vmatprep.subr.mxu0 0.0
        %453 = vmatpush1.msra.mxu0 0.0
        %454 = vmatprep.subr.mxu0 0.0
        %455 = vmatpush1.msra.mxu0 0.0
        %456 = vmatprep.subr.mxu0 0.0
        %457 = vmatpush1.msra.mxu0 0.0
        %458 = vmatprep.subr.mxu0 0.0
        %459 = vmatpush1.msra.mxu0 0.0
        %460 = vmatprep.subr.mxu0 0.0
        %461 = vmatpush1.msra.mxu0 0.0
        %462 = vmatprep.subr.mxu0 0.0
        %463 = vmatpush1.msra.mxu0 0.0
        %464 = vmatprep.subr.mxu0 0.0
        %465 = vmatpush1.msra.mxu0 0.0
        %466 = vmatprep.subr.mxu0 0.0
        %467 = vmatpush1.msra.mxu0 0.0
        %468 = vmatprep.subr.mxu0 0.0
        %469 = vmatpush1.msra.mxu0 0.0
        %470 = vmatprep.subr.mxu0 0.0
        %471 = vmatpush1.msra.mxu0 0.0
        %472 = vmatprep.subr.mxu0 0.0
        %473 = vmatpush1.msra.mxu0 0.0
        %474 = vmatprep.subr.mxu0 0.0
        %475 = vmatpush1.msra.mxu0 0.0
        %476 = vmatprep.subr.mxu0 0.0
        %477 = vmatpush1.msra.mxu0 0.0
        %478 = vmatprep.mubr.f32.mxu0 0.0
        %479 = vmatmul.mubr.f32.gmra.mrb[0].mxu0 %v407
        %v480 = vpop.f32.mrb[0].mxu0
        %v481 = vadd.f32 %v401, %v480
        %v482 = vpop.f32.mrb[0].mxu0
        %v483 = vadd.f32 %v401, %v482
        %484 = vdwg.mxu0
        %v485 = vld [vmem:[%s4] sm:$0xff]
        %v486 = vld [vmem:[%s5] sm:$0xff]
        %488 = vset.pattern.permute.xlu0 0
        %489 = vperm.xlu0 %488, %v486
        %v490 = vpop.permute.xlu0 %489
        %vm492 = vcmask 48128
        %v494 = vsel %vm492, %v485, 0
        %vm496 = vcmask 1045504
        %v498 = vsel %vm496, %v394, 0
        %v501 = vsel %vm496, %v395, 0
        %503 = vmatprep.subr.mxu0 %v501
        %504 = vmatpush1.msra.mxu0 %v498
        %505 = vmatprep.subr.mxu0 0.0
        %506 = vmatpush1.msra.mxu0 0.0
        %507 = vmatprep.subr.mxu0 0.0
        %508 = vmatpush1.msra.mxu0 0.0
        %509 = vmatprep.subr.mxu0 0.0
        %510 = vmatpush1.msra.mxu0 0.0
        %511 = vmatprep.subr.mxu0 0.0
        %512 = vmatpush1.msra.mxu0 0.0
        %513 = vmatprep.subr.mxu0 0.0
        %514 = vmatpush1.msra.mxu0 0.0
        %515 = vmatprep.subr.mxu0 0.0
        %516 = vmatpush1.msra.mxu0 0.0
        %517 = vmatprep.subr.mxu0 0.0
        %518 = vmatpush1.msra.mxu0 0.0
        %519 = vmatprep.subr.mxu0 0.0
        %520 = vmatpush1.msra.mxu0 0.0
        %521 = vmatprep.subr.mxu0 0.0
        %522 = vmatpush1.msra.mxu0 0.0
        %523 = vmatprep.subr.mxu0 0.0
        %524 = vmatpush1.msra.mxu0 0.0
        %525 = vmatprep.subr.mxu0 0.0
        %526 = vmatpush1.msra.mxu0 0.0
        %527 = vmatprep.subr.mxu0 0.0
        %528 = vmatpush1.msra.mxu0 0.0
        %529 = vmatprep.subr.mxu0 0.0
        %530 = vmatpush1.msra.mxu0 0.0
        %531 = vmatprep.subr.mxu0 0.0
        %532 = vmatpush1.msra.mxu0 0.0
        %533 = vmatprep.subr.mxu0 0.0
        %534 = vmatpush1.msra.mxu0 0.0
        %535 = vmatprep.subr.mxu0 0.0
        %536 = vmatpush1.msra.mxu0 0.0
        %537 = vmatprep.subr.mxu0 0.0
        %538 = vmatpush1.msra.mxu0 0.0
        %539 = vmatprep.subr.mxu0 0.0
        %540 = vmatpush1.msra.mxu0 0.0
        %541 = vmatprep.subr.mxu0 0.0
        %542 = vmatpush1.msra.mxu0 0.0
        %543 = vmatprep.subr.mxu0 0.0
        %544 = vmatpush1.msra.mxu0 0.0
        %545 = vmatprep.subr.mxu0 0.0
        %546 = vmatpush1.msra.mxu0 0.0
        %547 = vmatprep.subr.mxu0 0.0
        %548 = vmatpush1.msra.mxu0 0.0
        %549 = vmatprep.subr.mxu0 0.0
        %550 = vmatpush1.msra.mxu0 0.0
        %551 = vmatprep.subr.mxu0 0.0
        %552 = vmatpush1.msra.mxu0 0.0
        %553 = vmatprep.subr.mxu0 0.0
        %554 = vmatpush1.msra.mxu0 0.0
        %555 = vmatprep.subr.mxu0 0.0
        %556 = vmatpush1.msra.mxu0 0.0
        %557 = vmatprep.subr.mxu0 0.0
        %558 = vmatpush1.msra.mxu0 0.0
        %559 = vmatprep.subr.mxu0 0.0
        %560 = vmatpush1.msra.mxu0 0.0
        %561 = vmatprep.subr.mxu0 0.0
        %562 = vmatpush1.msra.mxu0 0.0
        %563 = vmatprep.subr.mxu0 0.0
        %564 = vmatpush1.msra.mxu0 0.0
        %565 = vmatprep.subr.mxu0 0.0
        %566 = vmatpush1.msra.mxu0 0.0
        %567 = vmatprep.mubr.f32.mxu0 0.0
        %568 = vmatmul.mubr.f32.gmra.mrb[0].mxu0 %v494
        %v569 = vpop.f32.mrb[0].mxu0
        %v570 = vadd.f32 %v490, %v569
        %v571 = vpop.f32.mrb[0].mxu0
        %v572 = vadd.f32 %v490, %v571
        %573 = vdwg.mxu0
        %s574 = smul.u32 %s29, 128
        %s575 = sshra.s32 %s574, 7
        %s576 = sand.u32 %s574, 127
        %s577 = smul.addr %s575, 4
        %s578 = scalar_lea.vmem %s386, %s577
        %v579 = vld [vmem:[%s578] sm:$0xf]
        %v580 = vld [vmem:[%s2] sm:$0xff]
        %v581 = vld [vmem:[%s3] sm:$0xff]
        %583 = vset.pattern.permute.xlu0 0
        %584 = vperm.xlu0 %583, %v581
        %v585 = vpop.permute.xlu0 %584
        %v588 = vsel %vm405, %v580, 0
        %v591 = vsel %vm409, %v579, 0
        %593 = vmatprep.subr.mxu0 0.0
        %594 = vmatpush1.msra.mxu0 %v591
        %595 = vmatprep.subr.mxu0 0.0
        %596 = vmatpush1.msra.mxu0 0.0
        %597 = vmatprep.subr.mxu0 0.0
        %598 = vmatpush1.msra.mxu0 0.0
        %599 = vmatprep.subr.mxu0 0.0
        %600 = vmatpush1.msra.mxu0 0.0
        %601 = vmatprep.subr.mxu0 0.0
        %602 = vmatpush1.msra.mxu0 0.0
        %603 = vmatprep.subr.mxu0 0.0
        %604 = vmatpush1.msra.mxu0 0.0
        %605 = vmatprep.subr.mxu0 0.0
        %606 = vmatpush1.msra.mxu0 0.0
        %607 = vmatprep.subr.mxu0 0.0
        %608 = vmatpush1.msra.mxu0 0.0
        %609 = vmatprep.subr.mxu0 0.0
        %610 = vmatpush1.msra.mxu0 0.0
        %611 = vmatprep.subr.mxu0 0.0
        %612 = vmatpush1.msra.mxu0 0.0
        %613 = vmatprep.subr.mxu0 0.0
        %614 = vmatpush1.msra.mxu0 0.0
        %615 = vmatprep.subr.mxu0 0.0
        %616 = vmatpush1.msra.mxu0 0.0
        %617 = vmatprep.subr.mxu0 0.0
        %618 = vmatpush1.msra.mxu0 0.0
        %619 = vmatprep.subr.mxu0 0.0
        %620 = vmatpush1.msra.mxu0 0.0
        %621 = vmatprep.subr.mxu0 0.0
        %622 = vmatpush1.msra.mxu0 0.0
        %623 = vmatprep.subr.mxu0 0.0
        %624 = vmatpush1.msra.mxu0 0.0
        %625 = vmatprep.subr.mxu0 0.0
        %626 = vmatpush1.msra.mxu0 0.0
        %627 = vmatprep.subr.mxu0 0.0
        %628 = vmatpush1.msra.mxu0 0.0
        %629 = vmatprep.subr.mxu0 0.0
        %630 = vmatpush1.msra.mxu0 0.0
        %631 = vmatprep.subr.mxu0 0.0
        %632 = vmatpush1.msra.mxu0 0.0
        %633 = vmatprep.subr.mxu0 0.0
        %634 = vmatpush1.msra.mxu0 0.0
        %635 = vmatprep.subr.mxu0 0.0
        %636 = vmatpush1.msra.mxu0 0.0
        %637 = vmatprep.subr.mxu0 0.0
        %638 = vmatpush1.msra.mxu0 0.0
        %639 = vmatprep.subr.mxu0 0.0
        %640 = vmatpush1.msra.mxu0 0.0
        %641 = vmatprep.subr.mxu0 0.0
        %642 = vmatpush1.msra.mxu0 0.0
        %643 = vmatprep.subr.mxu0 0.0
        %644 = vmatpush1.msra.mxu0 0.0
        %645 = vmatprep.subr.mxu0 0.0
        %646 = vmatpush1.msra.mxu0 0.0
        %647 = vmatprep.subr.mxu0 0.0
        %648 = vmatpush1.msra.mxu0 0.0
        %649 = vmatprep.subr.mxu0 0.0
        %650 = vmatpush1.msra.mxu0 0.0
        %651 = vmatprep.subr.mxu0 0.0
        %652 = vmatpush1.msra.mxu0 0.0
        %653 = vmatprep.subr.mxu0 0.0
        %654 = vmatpush1.msra.mxu0 0.0
        %655 = vmatprep.subr.mxu0 0.0
        %656 = vmatpush1.msra.mxu0 0.0
        %657 = vmatprep.mubr.f32.mxu0 0.0
        %658 = vmatmul.mubr.f32.gmra.mrb[0].mxu0 %v588
        %v659 = vpop.f32.mrb[0].mxu0
        %v660 = vadd.f32 %v585, %v659
        %v661 = vpop.f32.mrb[0].mxu0
        %662 = vdwg.mxu0
        %v663 = vpack.c.bf16 %v660, %v660
        %v664 = vpack.c.bf16 %v570, %v570
        %v665 = vpack.c.bf16 %v572, %v572
        %666 = vxpose.xlu0.c.b16.start [1/8] %v663, 128
        %667 = vxpose.xlu0.c.b16.cont [2/8] 0, 128
        %668 = vxpose.xlu0.c.b16.cont [3/8] 0, 128
        %669 = vxpose.xlu0.c.b16.cont [4/8] 0, 128
        %670 = vxpose.xlu0.c.b16.cont [5/8] 0, 128
        %671 = vxpose.xlu0.c.b16.cont [6/8] 0, 128
        %672 = vxpose.xlu0.c.b16.cont [7/8] 0, 128
        %673 = vxpose.xlu0.c.b16.end [8/8] 0, 128
        %v674 = vpop.trf.xlu0
        %v675 = vpop.trf.xlu0
        %v676 = vpop.trf.xlu0
        %v677 = vpop.trf.xlu0
        %v678 = vpop.trf.xlu0
        %v679 = vpop.trf.xlu0
        %v680 = vpop.trf.xlu0
        %v681 = vpop.trf.xlu0
        %vm682 = vcmask 64512
        %v684 = vsel %vm682, %v674, 0
        %v687 = vsel %vm682, %v675, 0
        %v690 = vsel %vm682, %v676, 0
        %v693 = vsel %vm682, %v677, 0
        %v696 = vsel %vm682, %v678, 0
        %v699 = vsel %vm682, %v679, 0
        %v702 = vsel %vm682, %v680, 0
        %v705 = vsel %vm682, %v681, 0
        %v708 = vsel %vm409, %v664, 0
        %v711 = vsel %vm409, %v665, 0
        %713 = vmatprep.subr.bf16.mxu0 %v711
        %714 = vmatpush1.bf16.msra.mxu0 %v708
        %715 = vmatprep.subr.bf16.mxu0 0
        %716 = vmatpush1.bf16.msra.mxu0 0
        %717 = vmatprep.subr.bf16.mxu0 0
        %718 = vmatpush1.bf16.msra.mxu0 0
        %719 = vmatprep.subr.bf16.mxu0 0
        %720 = vmatpush1.bf16.msra.mxu0 0
        %721 = vmatprep.subr.bf16.mxu0 0
        %722 = vmatpush1.bf16.msra.mxu0 0
        %723 = vmatprep.subr.bf16.mxu0 0
        %724 = vmatpush1.bf16.msra.mxu0 0
        %725 = vmatprep.subr.bf16.mxu0 0
        %726 = vmatpush1.bf16.msra.mxu0 0
        %727 = vmatprep.subr.bf16.mxu0 0
        %728 = vmatpush1.bf16.msra.mxu0 0
        %729 = vmatprep.subr.bf16.mxu0 0
        %730 = vmatpush1.bf16.msra.mxu0 0
        %731 = vmatprep.subr.bf16.mxu0 0
        %732 = vmatpush1.bf16.msra.mxu0 0
        %733 = vmatprep.subr.bf16.mxu0 0
        %734 = vmatpush1.bf16.msra.mxu0 0
        %735 = vmatprep.subr.bf16.mxu0 0
        %736 = vmatpush1.bf16.msra.mxu0 0
        %737 = vmatprep.subr.bf16.mxu0 0
        %738 = vmatpush1.bf16.msra.mxu0 0
        %739 = vmatprep.subr.bf16.mxu0 0
        %740 = vmatpush1.bf16.msra.mxu0 0
        %741 = vmatprep.subr.bf16.mxu0 0
        %742 = vmatpush1.bf16.msra.mxu0 0
        %743 = vmatprep.subr.bf16.mxu0 0
        %744 = vmatpush1.bf16.msra.mxu0 0
        %745 = vmatprep.mubr.bf16.mxu0 0
        %746 = vmatmul.mubr.bf16.gmra.mrb[0].mxu0 %v684
        %v747 = vpop.f32.mrb[0].mxu0
        %v748 = vadd.f32 0.0, %v747
        %v749 = vpop.f32.mrb[0].mxu0
        %v750 = vadd.f32 0.0, %v749
        %v751 = vpop.f32.mrb[0].mxu0
        %v752 = vadd.f32 0.0, %v751
        %v753 = vpop.f32.mrb[0].mxu0
        %v754 = vadd.f32 0.0, %v753
        %755 = vmatprep.mubr.bf16.mxu0 0
        %756 = vmatmul.mubr.bf16.gmra.mrb[0].mxu0 %v687
        %v757 = vpop.f32.mrb[0].mxu0
        %v758 = vadd.f32 0.0, %v757
        %v759 = vpop.f32.mrb[0].mxu0
        %v760 = vadd.f32 0.0, %v759
        %v761 = vpop.f32.mrb[0].mxu0
        %v762 = vadd.f32 0.0, %v761
        %v763 = vpop.f32.mrb[0].mxu0
        %v764 = vadd.f32 0.0, %v763
        %765 = vmatprep.mubr.bf16.mxu0 0
        %766 = vmatmul.mubr.bf16.gmra.mrb[0].mxu0 %v690
        %v767 = vpop.f32.mrb[0].mxu0
        %v768 = vadd.f32 0.0, %v767
        %v769 = vpop.f32.mrb[0].mxu0
        %v770 = vadd.f32 0.0, %v769
        %v771 = vpop.f32.mrb[0].mxu0
        %v772 = vadd.f32 0.0, %v771
        %v773 = vpop.f32.mrb[0].mxu0
        %v774 = vadd.f32 0.0, %v773
        %775 = vmatprep.mubr.bf16.mxu0 0
        %776 = vmatmul.mubr.bf16.gmra.mrb[0].mxu0 %v693
        %v777 = vpop.f32.mrb[0].mxu0
        %v778 = vadd.f32 0.0, %v777
        %v779 = vpop.f32.mrb[0].mxu0
        %v780 = vadd.f32 0.0, %v779
        %v781 = vpop.f32.mrb[0].mxu0
        %v782 = vadd.f32 0.0, %v781
        %v783 = vpop.f32.mrb[0].mxu0
        %v784 = vadd.f32 0.0, %v783
        %785 = vmatprep.mubr.bf16.mxu0 0
        %786 = vmatmul.mubr.bf16.gmra.mrb[0].mxu0 %v696
        %v787 = vpop.f32.mrb[0].mxu0
        %v788 = vadd.f32 0.0, %v787
        %v789 = vpop.f32.mrb[0].mxu0
        %v790 = vadd.f32 0.0, %v789
        %v791 = vpop.f32.mrb[0].mxu0
        %v792 = vadd.f32 0.0, %v791
        %v793 = vpop.f32.mrb[0].mxu0
        %v794 = vadd.f32 0.0, %v793
        %795 = vmatprep.mubr.bf16.mxu0 0
        %796 = vmatmul.mubr.bf16.gmra.mrb[0].mxu0 %v699
        %v797 = vpop.f32.mrb[0].mxu0
        %v798 = vadd.f32 0.0, %v797
        %v799 = vpop.f32.mrb[0].mxu0
        %v800 = vadd.f32 0.0, %v799
        %v801 = vpop.f32.mrb[0].mxu0
        %v802 = vadd.f32 0.0, %v801
        %v803 = vpop.f32.mrb[0].mxu0
        %v804 = vadd.f32 0.0, %v803
        %805 = vmatprep.mubr.bf16.mxu0 0
        %806 = vmatmul.mubr.bf16.gmra.mrb[0].mxu0 %v702
        %v807 = vpop.f32.mrb[0].mxu0
        %v808 = vadd.f32 0.0, %v807
        %v809 = vpop.f32.mrb[0].mxu0
        %v810 = vadd.f32 0.0, %v809
        %v811 = vpop.f32.mrb[0].mxu0
        %v812 = vadd.f32 0.0, %v811
        %v813 = vpop.f32.mrb[0].mxu0
        %v814 = vadd.f32 0.0, %v813
        %815 = vmatprep.mubr.bf16.mxu0 0
        %816 = vmatmul.mubr.bf16.gmra.mrb[0].mxu0 %v705
        %v817 = vpop.f32.mrb[0].mxu0
        %v818 = vadd.f32 0.0, %v817
        %v819 = vpop.f32.mrb[0].mxu0
        %v820 = vadd.f32 0.0, %v819
        %v821 = vpop.f32.mrb[0].mxu0
        %v822 = vadd.f32 0.0, %v821
        %v823 = vpop.f32.mrb[0].mxu0
        %v824 = vadd.f32 0.0, %v823
        %825 = vdwg.mxu0
        %v826 = vmax.f32 %v748, %v750
        %827 = vmax.xlane.f32.xlu0 %v826
        %v828 = vpop.xlane.xlu0 %827
        %v829 = vmax.f32 %v752, %v754
        %830 = vmax.xlane.f32.xlu0 %v829
        %v831 = vpop.xlane.xlu0 %830
        %v832 = vmax.f32 %v758, %v760
        %833 = vmax.xlane.f32.xlu0 %v832
        %v834 = vpop.xlane.xlu0 %833
        %v835 = vmax.f32 %v762, %v764
        %836 = vmax.xlane.f32.xlu0 %v835
        %v837 = vpop.xlane.xlu0 %836
        %v838 = vmax.f32 %v768, %v770
        %839 = vmax.xlane.f32.xlu0 %v838
        %v840 = vpop.xlane.xlu0 %839
        %v841 = vmax.f32 %v772, %v774
        %842 = vmax.xlane.f32.xlu0 %v841
        %v843 = vpop.xlane.xlu0 %842
        %v844 = vmax.f32 %v778, %v780
        %845 = vmax.xlane.f32.xlu0 %v844
        %v846 = vpop.xlane.xlu0 %845
        %v847 = vmax.f32 %v782, %v784
        %848 = vmax.xlane.f32.xlu0 %v847
        %v849 = vpop.xlane.xlu0 %848
        %v850 = vmax.f32 %v788, %v790
        %851 = vmax.xlane.f32.xlu0 %v850
        %v852 = vpop.xlane.xlu0 %851
        %v853 = vmax.f32 %v792, %v794
        %854 = vmax.xlane.f32.xlu0 %v853
        %v855 = vpop.xlane.xlu0 %854
        %v856 = vmax.f32 %v798, %v800
        %857 = vmax.xlane.f32.xlu0 %v856
        %v858 = vpop.xlane.xlu0 %857
        %v859 = vmax.f32 %v802, %v804
        %860 = vmax.xlane.f32.xlu0 %v859
        %v861 = vpop.xlane.xlu0 %860
        %v862 = vmax.f32 %v808, %v810
        %863 = vmax.xlane.f32.xlu0 %v862
        %v864 = vpop.xlane.xlu0 %863
        %v865 = vmax.f32 %v812, %v814
        %866 = vmax.xlane.f32.xlu0 %v865
        %v867 = vpop.xlane.xlu0 %866
        %v868 = vmax.f32 %v818, %v820
        %869 = vmax.xlane.f32.xlu0 %v868
        %v870 = vpop.xlane.xlu0 %869
        %v871 = vmax.f32 %v822, %v824
        %872 = vmax.xlane.f32.xlu0 %v871
        %v873 = vpop.xlane.xlu0 %872
        %v874 = vsub.f32 %v748, %v828
        %v875 = vsub.f32 %v750, %v828
        %v876 = vsub.f32 %v752, %v831
        %v877 = vsub.f32 %v754, %v831
        %v878 = vsub.f32 %v758, %v834
        %v879 = vsub.f32 %v760, %v834
        %v880 = vsub.f32 %v762, %v837
        %v881 = vsub.f32 %v764, %v837
        %v882 = vsub.f32 %v768, %v840
        %v883 = vsub.f32 %v770, %v840
        %v884 = vsub.f32 %v772, %v843
        %v885 = vsub.f32 %v774, %v843
        %v886 = vsub.f32 %v778, %v846
        %v887 = vsub.f32 %v780, %v846
        %v888 = vsub.f32 %v782, %v849
        %v889 = vsub.f32 %v784, %v849
        %v890 = vsub.f32 %v788, %v852
        %v891 = vsub.f32 %v790, %v852
        %v892 = vsub.f32 %v792, %v855
        %v893 = vsub.f32 %v794, %v855
        %v894 = vsub.f32 %v798, %v858
        %v895 = vsub.f32 %v800, %v858
        %v896 = vsub.f32 %v802, %v861
        %v897 = vsub.f32 %v804, %v861
        %v898 = vsub.f32 %v808, %v864
        %v899 = vsub.f32 %v810, %v864
        %v900 = vsub.f32 %v812, %v867
        %v901 = vsub.f32 %v814, %v867
        %v902 = vsub.f32 %v818, %v870
        %v903 = vsub.f32 %v820, %v870
        %v904 = vsub.f32 %v822, %v873
        %v905 = vsub.f32 %v824, %v873
        %v906 = vmul.f32 %v874, 1.442695
        %v907 = vpow.pop %v906
        %v908 = vmul.f32 %v875, 1.442695
        %v909 = vpow.pop %v908
        %v910 = vmul.f32 %v876, 1.442695
        %v911 = vpow.pop %v910
        %v912 = vmul.f32 %v877, 1.442695
        %v913 = vpow.pop %v912
        %v914 = vmul.f32 %v878, 1.442695
        %v915 = vpow.pop %v914
        %v916 = vmul.f32 %v879, 1.442695
        %v917 = vpow.pop %v916
        %v918 = vmul.f32 %v880, 1.442695
        %v919 = vpow.pop %v918
        %v920 = vmul.f32 %v881, 1.442695
        %v921 = vpow.pop %v920
        %v922 = vmul.f32 %v882, 1.442695
        %v923 = vpow.pop %v922
        %v924 = vmul.f32 %v883, 1.442695
        %v925 = vpow.pop %v924
        %v926 = vmul.f32 %v884, 1.442695
        %v927 = vpow.pop %v926
        %v928 = vmul.f32 %v885, 1.442695
        %v929 = vpow.pop %v928
        %v930 = vmul.f32 %v886, 1.442695
        %v931 = vpow.pop %v930
        %v932 = vmul.f32 %v887, 1.442695
        %v933 = vpow.pop %v932
        %v934 = vmul.f32 %v888, 1.442695
        %v935 = vpow.pop %v934
        %v936 = vmul.f32 %v889, 1.442695
        %v937 = vpow.pop %v936
        %v938 = vmul.f32 %v890, 1.442695
        %v939 = vpow.pop %v938
        %v940 = vmul.f32 %v891, 1.442695
        %v941 = vpow.pop %v940
        %v942 = vmul.f32 %v892, 1.442695
        %v943 = vpow.pop %v942
        %v944 = vmul.f32 %v893, 1.442695
        %v945 = vpow.pop %v944
        %v946 = vmul.f32 %v894, 1.442695
        %v947 = vpow.pop %v946
        %v948 = vmul.f32 %v895, 1.442695
        %v949 = vpow.pop %v948
        %v950 = vmul.f32 %v896, 1.442695
        %v951 = vpow.pop %v950
        %v952 = vmul.f32 %v897, 1.442695
        %v953 = vpow.pop %v952
        %v954 = vmul.f32 %v898, 1.442695
        %v955 = vpow.pop %v954
        %v956 = vmul.f32 %v899, 1.442695
        %v957 = vpow.pop %v956
        %v958 = vmul.f32 %v900, 1.442695
        %v959 = vpow.pop %v958
        %v960 = vmul.f32 %v901, 1.442695
        %v961 = vpow.pop %v960
        %v962 = vmul.f32 %v902, 1.442695
        %v963 = vpow.pop %v962
        %v964 = vmul.f32 %v903, 1.442695
        %v965 = vpow.pop %v964
        %v966 = vmul.f32 %v904, 1.442695
        %v967 = vpow.pop %v966
        %v968 = vmul.f32 %v905, 1.442695
        %v969 = vpow.pop %v968
        %v970 = vadd.f32 %v907, %v909
        %971 = vadd.xlane.f32.xlu0 %v970
        %v972 = vpop.xlane.xlu0 %971
        %v973 = vadd.f32 %v911, %v913
        %974 = vadd.xlane.f32.xlu0 %v973
        %v975 = vpop.xlane.xlu0 %974
        %v976 = vadd.f32 %v915, %v917
        %977 = vadd.xlane.f32.xlu0 %v976
        %v978 = vpop.xlane.xlu0 %977
        %v979 = vadd.f32 %v919, %v921
        %980 = vadd.xlane.f32.xlu0 %v979
        %v981 = vpop.xlane.xlu0 %980
        %v982 = vadd.f32 %v923, %v925
        %983 = vadd.xlane.f32.xlu0 %v982
        %v984 = vpop.xlane.xlu0 %983
        %v985 = vadd.f32 %v927, %v929
        %986 = vadd.xlane.f32.xlu0 %v985
        %v987 = vpop.xlane.xlu0 %986
        %v988 = vadd.f32 %v931, %v933
        %989 = vadd.xlane.f32.xlu0 %v988
        %v990 = vpop.xlane.xlu0 %989
        %v991 = vadd.f32 %v935, %v937
        %992 = vadd.xlane.f32.xlu0 %v991
        %v993 = vpop.xlane.xlu0 %992
        %v994 = vadd.f32 %v939, %v941
        %995 = vadd.xlane.f32.xlu0 %v994
        %v996 = vpop.xlane.xlu0 %995
        %v997 = vadd.f32 %v943, %v945
        %998 = vadd.xlane.f32.xlu0 %v997
        %v999 = vpop.xlane.xlu0 %998
        %v1000 = vadd.f32 %v947, %v949
        %1001 = vadd.xlane.f32.xlu0 %v1000
        %v1002 = vpop.xlane.xlu0 %1001
        %v1003 = vadd.f32 %v951, %v953
        %1004 = vadd.xlane.f32.xlu0 %v1003
        %v1005 = vpop.xlane.xlu0 %1004
        %v1006 = vadd.f32 %v955, %v957
        %1007 = vadd.xlane.f32.xlu0 %v1006
        %v1008 = vpop.xlane.xlu0 %1007
        %v1009 = vadd.f32 %v959, %v961
        %1010 = vadd.xlane.f32.xlu0 %v1009
        %v1011 = vpop.xlane.xlu0 %1010
        %v1012 = vadd.f32 %v963, %v965
        %1013 = vadd.xlane.f32.xlu0 %v1012
        %v1014 = vpop.xlane.xlu0 %1013
        %v1015 = vadd.f32 %v967, %v969
        %1016 = vadd.xlane.f32.xlu0 %v1015
        %v1017 = vpop.xlane.xlu0 %1016
        %v1018 = vrcp.pop %v972
        %v1019 = vrcp.pop %v975
        %v1020 = vrcp.pop %v978
        %v1021 = vrcp.pop %v981
        %v1022 = vrcp.pop %v984
        %v1023 = vrcp.pop %v987
        %v1024 = vrcp.pop %v990
        %v1025 = vrcp.pop %v993
        %v1026 = vrcp.pop %v996
        %v1027 = vrcp.pop %v999
        %v1028 = vrcp.pop %v1002
        %v1029 = vrcp.pop %v1005
        %v1030 = vrcp.pop %v1008
        %v1031 = vrcp.pop %v1011
        %v1032 = vrcp.pop %v1014
        %v1033 = vrcp.pop %v1017
        %v1034 = vmul.f32 %v907, %v1018
        %v1035 = vmul.f32 %v909, %v1018
        %v1036 = vmul.f32 %v911, %v1019
        %v1037 = vmul.f32 %v913, %v1019
        %v1038 = vmul.f32 %v915, %v1020
        %v1039 = vmul.f32 %v917, %v1020
        %v1040 = vmul.f32 %v919, %v1021
        %v1041 = vmul.f32 %v921, %v1021
        %v1042 = vmul.f32 %v923, %v1022
        %v1043 = vmul.f32 %v925, %v1022
        %v1044 = vmul.f32 %v927, %v1023
        %v1045 = vmul.f32 %v929, %v1023
        %v1046 = vmul.f32 %v931, %v1024
        %v1047 = vmul.f32 %v933, %v1024
        %v1048 = vmul.f32 %v935, %v1025
        %v1049 = vmul.f32 %v937, %v1025
        %v1050 = vmul.f32 %v939, %v1026
        %v1051 = vmul.f32 %v941, %v1026
        %v1052 = vmul.f32 %v943, %v1027
        %v1053 = vmul.f32 %v945, %v1027
        %v1054 = vmul.f32 %v947, %v1028
        %v1055 = vmul.f32 %v949, %v1028
        %v1056 = vmul.f32 %v951, %v1029
        %v1057 = vmul.f32 %v953, %v1029
        %v1058 = vmul.f32 %v955, %v1030
        %v1059 = vmul.f32 %v957, %v1030
        %v1060 = vmul.f32 %v959, %v1031
        %v1061 = vmul.f32 %v961, %v1031
        %v1062 = vmul.f32 %v963, %v1032
        %v1063 = vmul.f32 %v965, %v1032
        %v1064 = vmul.f32 %v967, %v1033
        %v1065 = vmul.f32 %v969, %v1033
        %v1066 = vpack.c.bf16 %v481, %v481
        %v1067 = vpack.c.bf16 %v483, %v483
        %v1068 = vpack.c.bf16 %v1036, %v1034
        %v1069 = vpack.c.bf16 %v1037, %v1035
        %v1070 = vpack.c.bf16 %v1040, %v1038
        %v1071 = vpack.c.bf16 %v1041, %v1039
        %v1072 = vpack.c.bf16 %v1044, %v1042
        %v1073 = vpack.c.bf16 %v1045, %v1043
        %v1074 = vpack.c.bf16 %v1048, %v1046
        %v1075 = vpack.c.bf16 %v1049, %v1047
        %v1076 = vpack.c.bf16 %v1052, %v1050
        %v1077 = vpack.c.bf16 %v1053, %v1051
        %v1078 = vpack.c.bf16 %v1056, %v1054
        %v1079 = vpack.c.bf16 %v1057, %v1055
        %v1080 = vpack.c.bf16 %v1060, %v1058
        %v1081 = vpack.c.bf16 %v1061, %v1059
        %v1082 = vpack.c.bf16 %v1064, %v1062
        %v1083 = vpack.c.bf16 %v1065, %v1063
        %1084 = vmatprep.subr.bf16.mxu0 %v1069
        %1085 = vmatpush1.bf16.xpose.msra.mxu0 %v1068
        %1086 = vmatprep.subr.bf16.mxu0 %v1071
        %1087 = vmatpush1.bf16.xpose.msra.mxu0 %v1070
        %1088 = vmatprep.subr.bf16.mxu0 %v1073
        %1089 = vmatpush1.bf16.xpose.msra.mxu0 %v1072
        %1090 = vmatprep.subr.bf16.mxu0 %v1075
        %1091 = vmatpush1.bf16.xpose.msra.mxu0 %v1074
        %1092 = vmatprep.subr.bf16.mxu0 %v1077
        %1093 = vmatpush1.bf16.xpose.msra.mxu0 %v1076
        %1094 = vmatprep.subr.bf16.mxu0 %v1079
        %1095 = vmatpush1.bf16.xpose.msra.mxu0 %v1078
        %1096 = vmatprep.subr.bf16.mxu0 %v1081
        %1097 = vmatpush1.bf16.xpose.msra.mxu0 %v1080
        %1098 = vmatprep.subr.bf16.mxu0 %v1083
        %1099 = vmatpush1.bf16.xpose.msra.mxu0 %v1082
        %1100 = vmatprep.subr.bf16.mxu0 0
        %1101 = vmatpush1.bf16.xpose.msra.mxu0 0
        %1102 = vmatprep.subr.bf16.mxu0 0
        %1103 = vmatpush1.bf16.xpose.msra.mxu0 0
        %1104 = vmatprep.subr.bf16.mxu0 0
        %1105 = vmatpush1.bf16.xpose.msra.mxu0 0
        %1106 = vmatprep.subr.bf16.mxu0 0
        %1107 = vmatpush1.bf16.xpose.msra.mxu0 0
        %1108 = vmatprep.subr.bf16.mxu0 0
        %1109 = vmatpush1.bf16.xpose.msra.mxu0 0
        %1110 = vmatprep.subr.bf16.mxu0 0
        %1111 = vmatpush1.bf16.xpose.msra.mxu0 0
        %1112 = vmatprep.subr.bf16.mxu0 0
        %1113 = vmatpush1.bf16.xpose.msra.mxu0 0
        %1114 = vmatprep.subr.bf16.mxu0 0
        %1115 = vmatpush1.bf16.xpose.msra.mxu0 0
        %1116 = vmatprep.mubr.bf16.mxu0 %v1067
        %1117 = vmatmul.mubr.bf16.gmra.mrb[0].mxu0 %v1066
        %v1118 = vpop.f32.mrb[0].mxu0
        %v1119 = vadd.f32 0.0, %v1118
        %v1120 = vpop.f32.mrb[0].mxu0
        %v1121 = vpop.f32.mrb[0].mxu0
        %v1122 = vpop.f32.mrb[0].mxu0
        %1123 = vdwg.mxu0
        %v1124 = vld [vmem:[%s6] sm:$0xf]
        %v1125 = vld [vmem:[%s7] sm:$0xf]
        %1127 = vset.pattern.permute.xlu0 0
        %1128 = vperm.xlu0 %1127, %v1125
        %v1129 = vpop.permute.xlu0 %1128
        %v1132 = vsel %vm682, %v1124, 0
        %1134 = vmatprep.subr.mxu0 0.0
        %1135 = vmatpush1.msra.mxu0 %v1119
        %1136 = vmatprep.subr.mxu0 0.0
        %1137 = vmatpush1.msra.mxu0 0.0
        %1138 = vmatprep.subr.mxu0 0.0
        %1139 = vmatpush1.msra.mxu0 0.0
        %1140 = vmatprep.subr.mxu0 0.0
        %1141 = vmatpush1.msra.mxu0 0.0
        %1142 = vmatprep.subr.mxu0 0.0
        %1143 = vmatpush1.msra.mxu0 0.0
        %1144 = vmatprep.subr.mxu0 0.0
        %1145 = vmatpush1.msra.mxu0 0.0
        %1146 = vmatprep.subr.mxu0 0.0
        %1147 = vmatpush1.msra.mxu0 0.0
        %1148 = vmatprep.subr.mxu0 0.0
        %1149 = vmatpush1.msra.mxu0 0.0
        %1150 = vmatprep.subr.mxu0 0.0
        %1151 = vmatpush1.msra.mxu0 0.0
        %1152 = vmatprep.subr.mxu0 0.0
        %1153 = vmatpush1.msra.mxu0 0.0
        %1154 = vmatprep.subr.mxu0 0.0
        %1155 = vmatpush1.msra.mxu0 0.0
        %1156 = vmatprep.subr.mxu0 0.0
        %1157 = vmatpush1.msra.mxu0 0.0
        %1158 = vmatprep.subr.mxu0 0.0
        %1159 = vmatpush1.msra.mxu0 0.0
        %1160 = vmatprep.subr.mxu0 0.0
        %1161 = vmatpush1.msra.mxu0 0.0
        %1162 = vmatprep.subr.mxu0 0.0
        %1163 = vmatpush1.msra.mxu0 0.0
        %1164 = vmatprep.subr.mxu0 0.0
        %1165 = vmatpush1.msra.mxu0 0.0
        %1166 = vmatprep.subr.mxu0 0.0
        %1167 = vmatpush1.msra.mxu0 0.0
        %1168 = vmatprep.subr.mxu0 0.0
        %1169 = vmatpush1.msra.mxu0 0.0
        %1170 = vmatprep.subr.mxu0 0.0
        %1171 = vmatpush1.msra.mxu0 0.0
        %1172 = vmatprep.subr.mxu0 0.0
        %1173 = vmatpush1.msra.mxu0 0.0
        %1174 = vmatprep.subr.mxu0 0.0
        %1175 = vmatpush1.msra.mxu0 0.0
        %1176 = vmatprep.subr.mxu0 0.0
        %1177 = vmatpush1.msra.mxu0 0.0
        %1178 = vmatprep.subr.mxu0 0.0
        %1179 = vmatpush1.msra.mxu0 0.0
        %1180 = vmatprep.subr.mxu0 0.0
        %1181 = vmatpush1.msra.mxu0 0.0
        %1182 = vmatprep.subr.mxu0 0.0
        %1183 = vmatpush1.msra.mxu0 0.0
        %1184 = vmatprep.subr.mxu0 0.0
        %1185 = vmatpush1.msra.mxu0 0.0
        %1186 = vmatprep.subr.mxu0 0.0
        %1187 = vmatpush1.msra.mxu0 0.0
        %1188 = vmatprep.subr.mxu0 0.0
        %1189 = vmatpush1.msra.mxu0 0.0
        %1190 = vmatprep.subr.mxu0 0.0
        %1191 = vmatpush1.msra.mxu0 0.0
        %1192 = vmatprep.subr.mxu0 0.0
        %1193 = vmatpush1.msra.mxu0 0.0
        %1194 = vmatprep.subr.mxu0 0.0
        %1195 = vmatpush1.msra.mxu0 0.0
        %1196 = vmatprep.subr.mxu0 0.0
        %1197 = vmatpush1.msra.mxu0 0.0
        %1198 = vmatprep.mubr.f32.mxu0 0.0
        %1199 = vmatmul.mubr.f32.gmra.mrb[0].mxu0 %v1132
        %v1200 = vpop.f32.mrb[0].mxu0
        %v1201 = vadd.f32 %v1129, %v1200
        %v1202 = vpop.f32.mrb[0].mxu0
        %1203 = vdwg.mxu0
        %1204 = vst [vmem:[%s381] sm:$0xf] %v1201
        %s1205 = sand.u32 %s266, 1
        %s1206 = scalar_lea.sflag [#allocation3], %s1205
        %s1207 = sand.u32 %s266, 1
        %s1208 = smul.addr %s1207, 4
        %s1209 = scalar_lea.vmem [#allocation2], %s1208
        // Predicated region
        $region61: #{tpu_custom_call.1} parent=59 // pred_check
          %p1210 = pneg %p276
        $region62: #{tpu_custom_call.1} parent=59 // pred_check_branch
          %1212 = sbr.rel (%p1210) target = $region64
        $region63: #{tpu_custom_call.1} parent=59 // pred_region
          %s1214 = ssub.s32 64, 64
          %1215 = vsyncadd %s1206, %s1214
          %s1216 = smul.addr %s28, 2
          %s1217 = sadd.s32 %s29, %s1216
          %s1218 = smul.addr %s1217, 64
          %s1219 = scalar_lea.hbm %s10, %s1218
          %s1221 = sshll.u32 %s1209, 4
          %s1222 = int_to_ptr.vmem [resolvable:$true] %s1221
          %1224 = dma.vmem_to_hbm [thread:$0]  %s1222, 64, %s1219, %s1206
        $region64: #{tpu_custom_call.1} parent=59 // pred_fallthru
          _
      $region60: #{tpu_custom_call.1} parent=5 // pred_fallthru
        _
      %p1225 = scmp.le.s32.totalorder 2, %s19
      // Predicated region
      $region65: #{tpu_custom_call.1} parent=5 // pred_check
        %p1226 = pneg %p1225
      $region66: #{tpu_custom_call.1} parent=5 // pred_check_branch
        %1228 = sbr.rel (%p1226) target = $region68
      $region67: #{tpu_custom_call.1} parent=5 // pred_region
        %s1229 = ssub.s32 %s19, 2
        // Predicated region
        $region69: #{tpu_custom_call.1} parent=67 // pred_check
          %p1230 = pneg %p282
        $region70: #{tpu_custom_call.1} parent=67 // pred_check_branch
          %1232 = sbr.rel (%p1230) target = $region72
        $region71: #{tpu_custom_call.1} parent=67 // pred_region
          %s1233 = sand.u32 %s267, 1
          %s1234 = scalar_lea.sflag [#allocation3], %s1233
          %s1235 = sand.u32 %s267, 1
          %s1236 = smul.addr %s1235, 4
          %s1237 = scalar_lea.vmem [#allocation2], %s1236
          %1238 = dma.done %s1234, 64
        $region72: #{tpu_custom_call.1} parent=67 // pred_fallthru
          _
      $region68: #{tpu_custom_call.1} parent=5 // pred_fallthru
        _
    $region6: #{tpu_custom_call.1} parent=1 // loop_footer
      %s23 = sadd.s32 1, %s19
    $region7: #{tpu_custom_call.1} parent=1 // loop_footer_branch
      %18 = sbr.rel target = $region3
    $region8: #{tpu_custom_call.1} parent=1 // loop_exit
      _
    %1239 = vsyncpa [#allocation3], 1
    %s1240 = scalar_lea.sflag [#allocation3], 1
    %1241 = vsyncpa %s1240, 1

</llo_original>
